<compile_context>
chip_gen: v7x
topology: tpu7x:2x2x1
jax: 0.10.0
libtpu: 0.0.40
codegen_flags: <defaults>
</compile_context>

<pallas_src>
import functools
import math

import jax
import jax.numpy as jnp
from jax.experimental import pallas as pl
from jax.experimental.pallas import tpu as pltpu

_LN_EPS = 1e-5  # PyTorch nn.LayerNorm default


# ----------------------------------------------------------------------------
# helpers
# ----------------------------------------------------------------------------
def _round_up(n, m):
    return ((n + m - 1) // m) * m


def _pad2d(a, rows, cols):
    r, c = a.shape
    if r == rows and c == cols:
        return a
    return jnp.pad(a, ((0, rows - r), (0, cols - c)))


# ----------------------------------------------------------------------------
# QKV projection: lane-dense, N-tiled, bf16 MXU operands, f32 output
# ----------------------------------------------------------------------------
def _qkv_kernel(x_ref, w_ref, o_ref):
    o_ref[...] = jnp.dot(x_ref[...], w_ref[...],
                         preferred_element_type=jnp.float32).astype(o_ref.dtype)


def qkv_proj_pallas(x_bf16, w_bf16, *, tm):
    """x: (Mp, Dp) bf16; w: (Dp, 3*Dp) bf16 -> (Mp, 3*Dp) f32."""
    Mp, Dp = x_bf16.shape
    Np = w_bf16.shape[1]
    assert Np % Dp == 0
    return pl.pallas_call(
        _qkv_kernel,
        out_shape=jax.ShapeDtypeStruct((Mp, Np), jnp.float32),
        grid_spec=pltpu.PrefetchScalarGridSpec(
            num_scalar_prefetch=0,
            grid=(Mp // tm, Np // Dp),
            in_specs=[
                pl.BlockSpec((tm, Dp), lambda i, n: (i, 0)),
                pl.BlockSpec((Dp, Dp), lambda i, n: (0, n)),
            ],
            out_specs=pl.BlockSpec((tm, Dp), lambda i, n: (i, n)),
        ),
        compiler_params=pltpu.CompilerParams(
            dimension_semantics=("parallel", "parallel")),
    )(x_bf16, w_bf16)


# ----------------------------------------------------------------------------
# attention: all heads of one batch element per grid step
# ----------------------------------------------------------------------------
def _attention_kernel(q_ref, k_ref, v_ref, o_ref, *, n_head, d_head, scale):
    # q_ref/k_ref/v_ref: (1, S, Dp) f32 (only first n_head*d_head cols used)
    # o_ref: (1, D, S) f32 laid out as (n_head, d_head, S) flattened, i.e. the
    # reference's y.transpose(2,3) memory order.
    q_all = q_ref[0]
    k_all = k_ref[0]
    v_all = v_ref[0]
    head_outs = []
    for h in range(n_head):                      # static unroll over heads
        lo = h * d_head
        q = q_all[:, lo:lo + d_head]             # (S, dh)
        k = k_all[:, lo:lo + d_head]
        v = v_all[:, lo:lo + d_head]
        s = jax.lax.dot_general(q, k, (((1,), (1,)), ((), ())),
                                preferred_element_type=jnp.float32) * scale
        s = s - jnp.max(s, axis=-1, keepdims=True)
        e = jnp.exp(s)
        p = e * pl.reciprocal(jnp.sum(e, axis=-1, keepdims=True), approx=True)
        # y^T directly (dh, S): contract v's seq axis with p's key axis.
        y_t = jax.lax.dot_general(v, p, (((0,), (1,)), ((), ())),
                                  preferred_element_type=jnp.float32)
        head_outs.append(y_t)
    o_ref[0] = jnp.concatenate(head_outs, axis=0)   # (D, S)


def attention_pallas(q3, k3, v3, *, n_head, d_head, scale):
    """q3/k3/v3: (B, S, Dp) f32 -> (B, D, S) f32 (head-merge quirk layout)."""
    # TODO(synk): kv_padding_mask / causal-mask branches not implemented
    # (EncoderBlock calls MHA with defaults: no mask).
    B, S, Dp = q3.shape
    D = n_head * d_head
    kernel = functools.partial(_attention_kernel, n_head=n_head,
                               d_head=d_head, scale=float(scale))
    return pl.pallas_call(
        kernel,
        out_shape=jax.ShapeDtypeStruct((B, D, S), jnp.float32),
        grid_spec=pltpu.PrefetchScalarGridSpec(
            num_scalar_prefetch=0,
            grid=(B,),
            in_specs=[
                pl.BlockSpec((1, S, Dp), lambda b: (b, 0, 0)),
                pl.BlockSpec((1, S, Dp), lambda b: (b, 0, 0)),
                pl.BlockSpec((1, S, Dp), lambda b: (b, 0, 0)),
            ],
            out_specs=pl.BlockSpec((1, D, S), lambda b: (b, 0, 0)),
        ),
        compiler_params=pltpu.CompilerParams(
            dimension_semantics=("parallel",)),
    )(q3, k3, v3)


# ----------------------------------------------------------------------------
# O projection fused with residual-add + LayerNorm1
# ----------------------------------------------------------------------------
def _oproj_add_ln_kernel(y_ref, w_ref, x_ref, g_ref, b_ref, o_ref, *, d_real):
    attn = jnp.dot(y_ref[...], w_ref[...], preferred_element_type=jnp.float32)
    v = x_ref[...] + attn
    # Padded columns of v are exactly zero (zero-padded x, zero weight/gamma/
    # beta columns), so sums over Dp equal sums over the true D.
    s1 = jnp.sum(v, axis=-1, keepdims=True)
    s2 = jnp.sum(v * v, axis=-1, keepdims=True)
    mean = s1 / d_real
    var = s2 / d_real - mean * mean
    inv = jax.lax.rsqrt(var + _LN_EPS)
    o_ref[...] = ((v - mean) * inv * g_ref[...] + b_ref[...]).astype(o_ref.dtype)


def oproj_add_ln_pallas(y_bf16, wo_bf16, x_f32, gamma, beta, *, d_real, tm):
    Mp, Dp = y_bf16.shape
    # TODO(synk): wo is kept fully resident (fine for Dp up to a few K); K/N
    # tiling would be needed for very large d_model on v7x's 64 MiB VMEM.
    kernel = functools.partial(_oproj_add_ln_kernel, d_real=float(d_real))
    return pl.pallas_call(
        kernel,
        out_shape=jax.ShapeDtypeStruct((Mp, Dp), jnp.float32),
        grid_spec=pltpu.PrefetchScalarGridSpec(
            num_scalar_prefetch=0,
            grid=(Mp // tm,),
            in_specs=[
                pl.BlockSpec((tm, Dp), lambda i: (i, 0)),
                pl.BlockSpec((Dp, Dp), lambda i: (0, 0)),
                pl.BlockSpec((tm, Dp), lambda i: (i, 0)),
                pl.BlockSpec((1, Dp), lambda i: (0, 0)),
                pl.BlockSpec((1, Dp), lambda i: (0, 0)),
            ],
            out_specs=pl.BlockSpec((tm, Dp), lambda i: (i, 0)),
        ),
        compiler_params=pltpu.CompilerParams(
            dimension_semantics=("parallel",)),
    )(y_bf16, wo_bf16, x_f32, gamma, beta)


# ----------------------------------------------------------------------------
# FFN fused with residual-add + LayerNorm2
#   out = LN2(x + ReLU(x @ W1 + b1) @ W2 + b2)
# ----------------------------------------------------------------------------
def _ffn_add_ln_kernel(x_ref, w1_ref, b1_ref, w2_ref, b2_ref, g_ref, be_ref,
                       o_ref, acc_ref, *, d_real):
    h_idx = pl.program_id(1)

    @pl.when(h_idx == 0)
    def _init():
        acc_ref[...] = jnp.zeros_like(acc_ref)

    # bf16 operands on the MXU with f32 accumulation; bias + ReLU stay in f32.
    xb = x_ref[...].astype(jnp.bfloat16)
    hid = jnp.dot(xb, w1_ref[...], preferred_element_type=jnp.float32)
    hid = jnp.maximum(hid + b1_ref[...], 0.0)
    acc_ref[...] += jnp.dot(hid.astype(jnp.bfloat16), w2_ref[...],
                            preferred_element_type=jnp.float32)

    @pl.when(h_idx == pl.num_programs(1) - 1)
    def _finalize():
        v = x_ref[...] + acc_ref[...] + b2_ref[...]
        s1 = jnp.sum(v, axis=-1, keepdims=True)
        s2 = jnp.sum(v * v, axis=-1, keepdims=True)
        mean = s1 / d_real
        var = s2 / d_real - mean * mean
        inv = jax.lax.rsqrt(var + _LN_EPS)
        o_ref[...] = ((v - mean) * inv * g_ref[...] + be_ref[...]).astype(o_ref.dtype)


def ffn_add_ln_pallas(x_f32, w1, b1, w2, b2, gamma, beta, *, d_real, tm,
                      th_max=512):
    """x: (Mp, Dp) f32 padded; w1: (D, H); w2: (H, D); biases/ln params raw."""
    Mp, Dp = x_f32.shape
    D, H = w1.shape
    Hp = _round_up(H, 128)
    th = min(th_max, Hp)
    Hp = _round_up(Hp, th)

    w1p = _pad2d(w1, Dp, Hp).astype(jnp.bfloat16)
    w2p = _pad2d(w2, Hp, Dp).astype(jnp.bfloat16)
    b1p = _pad2d(b1.reshape(1, H), 1, Hp)           # f32
    b2p = _pad2d(b2.reshape(1, D), 1, Dp)           # f32
    g2p = _pad2d(gamma.reshape(1, D), 1, Dp)
    be2p = _pad2d(beta.reshape(1, D), 1, Dp)

    grid = (Mp // tm, Hp // th)

    # VMEM budget: double-buffered tiles + f32 accumulator, capped well below
    # v7x's 64 MiB physical VMEM (review: no 32 MiB floor, no 64 MiB cap).
    est = (2 * tm * Dp * 4          # x tile (f32) x2 buffers
           + 2 * Dp * th * 2        # W1 chunk x2
           + 2 * th * 4             # b1 chunk x2
           + 2 * th * Dp * 2        # W2 chunk x2
           + 2 * 3 * Dp * 4         # b2, gamma, beta x2
           + tm * Dp * 4            # accumulator
           + 2 * tm * Dp * 4)       # output tile x2
    vmem_limit = int(min(48 * 1024 * 1024, max(8 * 1024 * 1024, 2 * est)))

    cost = pl.CostEstimate(
        flops=int(4 * Mp * Dp * Hp),
        transcendentals=0,
        bytes_accessed=int(Mp * Dp * 4 + Dp * Hp * 2 + Hp * Dp * 2
                           + Hp * 4 + 3 * Dp * 4 + Mp * Dp * 4),
    )

    kernel = functools.partial(_ffn_add_ln_kernel, d_real=float(d_real))
    return pl.pallas_call(
        kernel,
        out_shape=jax.ShapeDtypeStruct((Mp, Dp), jnp.float32),
        grid_spec=pltpu.PrefetchScalarGridSpec(
            num_scalar_prefetch=0,
            grid=grid,
            in_specs=[
                pl.BlockSpec((tm, Dp), lambda i, h: (i, 0)),   # x rows (resident)
                pl.BlockSpec((Dp, th), lambda i, h: (0, h)),   # W1 H-chunk
                pl.BlockSpec((1, th), lambda i, h: (0, h)),    # b1 H-chunk
                pl.BlockSpec((th, Dp), lambda i, h: (h, 0)),   # W2 H-chunk
                pl.BlockSpec((1, Dp), lambda i, h: (0, 0)),    # b2 (finalize)
                pl.BlockSpec((1, Dp), lambda i, h: (0, 0)),    # gamma2
                pl.BlockSpec((1, Dp), lambda i, h: (0, 0)),    # beta2
            ],
            out_specs=pl.BlockSpec((tm, Dp), lambda i, h: (i, 0)),
            scratch_shapes=[pltpu.VMEM((tm, Dp), jnp.float32)],
        ),
        compiler_params=pltpu.CompilerParams(
            dimension_semantics=("parallel", "arbitrary"),
            vmem_limit_bytes=vmem_limit),
        cost_estimate=cost,
    )(x_f32, w1p, b1p, w2p, b2p, g2p, be2p)


# ----------------------------------------------------------------------------
# full EncoderBlock forward
# ----------------------------------------------------------------------------
def encoder_block_forward(x, p):
    """x: (B, S, D) f32; p: parameter dict (weights stored as (in, out))."""
    B, S, D = x.shape
    nh = p["n_head"]
    dh = D // nh
    M = B * S

    Dp = _round_up(D, 128)                    # lane-dense model dim
    tm = min(256, _round_up(M, 16))           # bf16 sublane-tile multiple
    Mp = _round_up(M, tm)

    x2 = x.reshape(M, D)
    xp_f32 = _pad2d(x2, Mp, Dp)               # residual path (f32)
    xp_bf16 = xp_f32.astype(jnp.bfloat16)     # matmul path (bf16)

    # --- QKV projection (one call, N tiled into 128*k-wide lane-dense chunks)
    w_qkv = jnp.concatenate(
        [_pad2d(p["wq"], Dp, Dp), _pad2d(p["wk"], Dp, Dp), _pad2d(p["wv"], Dp, Dp)],
        axis=1).astype(jnp.bfloat16)                              # (Dp, 3*Dp)
    qkv = qkv_proj_pallas(xp_bf16, w_qkv, tm=tm)                  # (Mp, 3*Dp) f32

    q3 = qkv[:M, 0 * Dp:1 * Dp].reshape(B, S, Dp)
    k3 = qkv[:M, 1 * Dp:2 * Dp].reshape(B, S, Dp)
    v3 = qkv[:M, 2 * Dp:3 * Dp].reshape(B, S, Dp)

    # --- multi-head self-attention; head split/merge done inside the kernel
    scale = 1.0 / math.sqrt(D / nh)
    attn_y = attention_pallas(q3, k3, v3, n_head=nh, d_head=dh, scale=scale)

    # reference quirk: y.transpose(2,3).contiguous().view(B, T, -1) is exactly
    # a row-major reshape of the kernel's (B, D, S) output.
    y2 = attn_y.reshape(M, D)

    # --- O projection fused with residual add + LayerNorm1 ------------------
    # TODO(synk): F.dropout(p=p_drop) is stochastic; treated as identity (inference).
    yp = _pad2d(y2, Mp, Dp).astype(jnp.bfloat16)
    wo_p = _pad2d(p["wo"], Dp, Dp).astype(jnp.bfloat16)
    g1 = _pad2d(p["g1"].reshape(1, D), 1, Dp)
    be1 = _pad2d(p["be1"].reshape(1, D), 1, Dp)
    temp = oproj_add_ln_pallas(yp, wo_p, xp_f32, g1, be1, d_real=D, tm=tm)

    # --- FFN fused with residual add + LayerNorm2 ----------------------------
    out_p = ffn_add_ln_pallas(temp, p["w1"], p["bf1"], p["w2"], p["bf2"],
                              p["g2"], p["be2"], d_real=D, tm=tm)
    return out_p[:M, :D].reshape(B, S, D)


# ----------------------------------------------------------------------------
# pure-JAX reference (mirrors the PyTorch module exactly, dropout = identity)
# ----------------------------------------------------------------------------
def _reference_forward(x, p, eps=_LN_EPS):
    B, S, D = x.shape
    nh = p["n_head"]
    dh = D // nh

    def ln(v, g, b):
        m = v.mean(-1, keepdims=True)
        c = v - m
        var = (c * c).mean(-1, keepdims=True)
        return c / jnp.sqrt(var + eps) * g + b

    q = x @ p["wq"]
    k = x @ p["wk"]
    v = x @ p["wv"]
    q = q.reshape(B, S, nh, dh).transpose(0, 2, 1, 3)
    k = k.reshape(B, S, nh, dh).transpose(0, 2, 1, 3)
    v = v.reshape(B, S, nh, dh).transpose(0, 2, 1, 3)
    s = jnp.einsum("bhqd,bhkd->bhqk", q, k) / math.sqrt(D / nh)
    w = jax.nn.softmax(s, axis=-1)
    y = jnp.einsum("bhqk,bhkd->bhqd", w, v)
    y = y.transpose(0, 1, 3, 2).reshape(B, S, D)     # torch transpose(2,3).view
    attn = y @ p["wo"]
    temp = ln(x + attn, p["g1"], p["be1"])
    ffn = jnp.maximum(temp @ p["w1"] + p["bf1"], 0.0) @ p["w2"] + p["bf2"]
    return ln(temp + ffn, p["g2"], p["be2"])


# ----------------------------------------------------------------------------
if __name__ == "__main__":
    # config: d_model=32, n_head=4, hidden=4*d_model=128; batch=2, seq=8
    B, S, D, NH = 2, 8, 32, 4
    H = 4 * D

    key = jax.random.PRNGKey(0)
    ks = jax.random.split(key, 13)
    f32 = jnp.float32

    x = jax.random.normal(ks[0], (B, S, D), f32)
    params = {
        "n_head": NH,
        # linear weights stored (in, out) == PyTorch weight.T
        "wq": jax.random.normal(ks[1], (D, D), f32) * 0.05,
        "wk": jax.random.normal(ks[2], (D, D), f32) * 0.05,
        "wv": jax.random.normal(ks[3], (D, D), f32) * 0.05,
        "wo": jax.random.normal(ks[4], (D, D), f32) * 0.05,
        "g1": 1.0 + 0.1 * jax.random.normal(ks[5], (D,), f32),
        "be1": 0.1 * jax.random.normal(ks[6], (D,), f32),
        "g2": 1.0 + 0.1 * jax.random.normal(ks[7], (D,), f32),
        "be2": 0.1 * jax.random.normal(ks[8], (D,), f32),
        "w1": jax.random.normal(ks[9], (D, H), f32) * 0.05,
        "bf1": 0.05 * jax.random.normal(ks[10], (H,), f32),
        "w2": jax.random.normal(ks[11], (H, D), f32) * 0.05,
        "bf2": 0.05 * jax.random.normal(ks[12], (D,), f32),
    }

    out = encoder_block_forward(x, params)
    out = jax.block_until_ready(out)

    ref = _reference_forward(x, params)
    assert out.shape == (B, S, D)
    max_err = float(jnp.max(jnp.abs(out - ref)))
    # bf16 MXU operands + approx softmax reciprocal => loosened tolerance
    assert jnp.allclose(out, ref, atol=3e-2, rtol=3e-2), f"max abs err {max_err}"

    print("KERNEL_OK")
</pallas_src>

<mosaic_0001>
module attributes {stable_mosaic.version = 11 : i64} {
  func.func @_qkv_kernel(%arg0: i32, %arg1: i32, %arg2: memref<16x128xbf16, #tpu.memory_space<vmem>>, %arg3: memref<128x128xbf16, #tpu.memory_space<vmem>>, %arg4: memref<16x128xf32, #tpu.memory_space<vmem>>) attributes {dimension_semantics = [#tpu.dimension_semantics<parallel>, #tpu.dimension_semantics<parallel>], iteration_bounds = array<i64: 1, 3>, scalar_prefetch = 0 : i64, scratch_operands = 0 : i64, tpu.core_type = #tpu.core_type<tc>, window_params = [{transform_indices = @transform_0, window_bounds = array<i64: 16, 128>}, {transform_indices = @transform_1, window_bounds = array<i64: 128, 128>}, {transform_indices = @transform_2, window_bounds = array<i64: 16, 128>}]} {
    %c0 = arith.constant 0 : index
    %c0_0 = arith.constant 0 : index
    %0 = vector.load %arg2[%c0, %c0_0] : memref<16x128xbf16, #tpu.memory_space<vmem>>, vector<16x128xbf16>
    %c0_1 = arith.constant 0 : index
    %c0_2 = arith.constant 0 : index
    %1 = vector.load %arg3[%c0_1, %c0_2] : memref<128x128xbf16, #tpu.memory_space<vmem>>, vector<128x128xbf16>
    %cst = arith.constant dense<0.000000e+00> : vector<16x128xf32>
    %2 = tpu.matmul %0, %1, %cst {dimension_numbers = #tpu.dot_dimension_numbers<[1], [0], [0], [1], [0, 0, 1, 1], [], []>} : vector<16x128xbf16>, vector<128x128xbf16>, vector<16x128xf32> -> vector<16x128xf32>
    %c0_3 = arith.constant 0 : index
    %c0_4 = arith.constant 0 : index
    %3 = vector.load %arg4[%c0_3, %c0_4] : memref<16x128xf32, #tpu.memory_space<vmem>>, vector<16x128xf32>
    tpu.vector_store %arg4[%c0_3, %c0_4], %2 {strides = array<i32>} : memref<16x128xf32, #tpu.memory_space<vmem>>, vector<16x128xf32>,
    return
  }
  func.func @transform_0(%arg0: i32, %arg1: i32) -> (i32, i32) {
    %c0_i32 = arith.constant 0 : i32
    %c0_i32_0 = arith.constant 0 : i32
    return %arg0, %c0_i32 : i32, i32
  }
  func.func @transform_1(%arg0: i32, %arg1: i32) -> (i32, i32) {
    %c0_i32 = arith.constant 0 : i32
    %c0_i32_0 = arith.constant 0 : i32
    return %c0_i32, %arg1 : i32, i32
  }
  func.func @transform_2(%arg0: i32, %arg1: i32) -> (i32, i32) {
    %c0_i32 = arith.constant 0 : i32
    return %arg0, %arg1 : i32, i32
  }
}

</mosaic_0001>

<llo_original>
// kernel: tpu_custom_call.1
$region0: #{tpu_custom_call.1}
  #allocation0 [shape = 'u32[]', space=smem, size = 0x4, offset = 0x4, fixed_abs, tag = 'smem constant byte address 0x4 - core index']
  #allocation1 [shape = 'u32[144,128]{1,0:T(1,128)}', space=vmem, size = 0x12000, scoped, tag = 'internal scratch']
  %s0 = inlined_call_operand.hbm [shape: bf16[16,128], index: 0, kind: input, shape index: {}]
  %s1 = inlined_call_operand.hbm [shape: bf16[128,384], index: 1, kind: input, shape index: {}]
  %s2 = inlined_call_operand.hbm [shape: f32[16,384], index: 2, kind: output, shape index: {}]
  %s3 = sld [smem:[#allocation0]]
  $region49: #{tpu_custom_call.1} parent=0
    _
  %s5 = ssub.s32 1, %s3
  %s6 = scalar_select 0, %s5, %s3
  $region1: #{tpu_custom_call.1} parent=0
    #allocation2 [shape = 'u8[4096]{0}', space=vmem, size = 0x1000, scoped, tag = 'input window, operand 0, single buffered']
    #allocation3 [shape = 's32[2]{0}', space=sflag, size = 0x8, scoped, tag = 'scoped memory for tpu_custom_call.1']
    #allocation4 [shape = 's32[2]{0}', space=sflag, size = 0x8, scoped, tag = 'scoped memory for tpu_custom_call.1']
    #allocation5 [shape = 'u8[65536]{0}', space=vmem, size = 0x10000, scoped, tag = 'input window, operand 1']
    #allocation6 [shape = 's32[2]{0}', space=sflag, size = 0x8, scoped, tag = 'scoped memory for tpu_custom_call.1']
    #allocation7 [shape = 'u8[16384]{0}', space=vmem, size = 0x4000, scoped, tag = 'output window, operand 0']
    %7 = vsyncpa [#allocation3], 0
    %8 = vsyncpa [#allocation6], 0
    %s9 = scalar_lea.sflag [#allocation6], 1
    %10 = vsyncpa %s9, 0
    %11 = vsyncpa [#allocation4], 0
    %s12 = scalar_lea.sflag [#allocation4], 1
    %13 = vsyncpa %s12, 0
    loop: start=0, step=1, limit=5
    $region2: #{tpu_custom_call.1} parent=1 // loop_pre_header
      _
    $region3: #{tpu_custom_call.1} parent=1 // loop_header
      %s15 = sphi 0, %s19
      %p16 = scmp.ge.s32.totalorder %s15, 5
      %s22 = sphi 0, %s34
      %s23 = sphi 0, %s30
      %s24 = sphi 0, %s22
      %s25 = sphi 0, %s23
      %s26 = sphi 0, %s24
      %s27 = sphi 0, %s25
      %s37 = sphi 0, %s39
      %s40 = sphi 0, %s37
      %s41 = sphi 0, %s40
      %s57 = sphi 0, %s41
      %s63 = sphi 0, %s65
      %s66 = sphi 0, %s63
      %s67 = sphi 0, %s66
      %s83 = sphi 0, %s67
      %s91 = sphi 0, %s93
      %s94 = sphi 0, %s91
      %s95 = sphi 0, %s94
      %s111 = sphi 0, %s95
    $region4: #{tpu_custom_call.1} parent=1 // loop_header_branch
      %18 = sbr.rel (%p16) target = $region8
    $region5: #{tpu_custom_call.1} parent=1 // loop_body
      %s20 = ssub.s32 %s15, 1
      %s21 = ssub.s32 %s15, 2
      %s28 = sadd.s32 1, %s23
      %p29 = scmp.ge.s32.totalorder %s28, 3
      %s30 = scalar_select %p29, 0, %s28
      %s31 = sadd.s32 1, %s22
      %s32 = scalar_select %p29, %s31, %s22
      %p33 = scmp.ge.s32.totalorder %s32, 1
      %s34 = scalar_select %p33, 0, %s32
      %s35 = ssub.s32 %s22, %s34
      %p36 = scmp.eq.s32.totalorder %s35, 0
      %s38 = sadd.s32 %s37, 1
      %s39 = scalar_select %p36, %s37, %s38
      %p42 = pneg %p36
      %p43 = scmp.eq.s32.totalorder %s15, 2
      %p44 = por %p42, %p43
      %p45 = scmp.ne.s32.totalorder %s37, %s40
      %p46 = scmp.eq.s32.totalorder %s15, 0
      %p47 = por %p45, %p46
      %p48 = scmp.ne.s32.totalorder %s37, %s40
      %p49 = scmp.eq.s32.totalorder %s20, 2
      %p50 = por %p48, %p49
      %p51 = scmp.ne.s32.totalorder %s40, %s41
      %p52 = scmp.eq.s32.totalorder %s20, 0
      %p53 = por %p51, %p52
      %p54 = scmp.ne.s32.totalorder %s40, %s41
      %p55 = scmp.eq.s32.totalorder %s21, 2
      %p56 = por %p54, %p55
      %p58 = scmp.ne.s32.totalorder %s41, %s57
      %p59 = scmp.eq.s32.totalorder %s21, 0
      %p60 = por %p58, %p59
      %s61 = ssub.s32 %s23, %s30
      %p62 = scmp.eq.s32.totalorder %s61, 0
      %s64 = sadd.s32 %s63, 1
      %s65 = scalar_select %p62, %s63, %s64
      %p68 = pneg %p62
      %p69 = scmp.eq.s32.totalorder %s15, 2
      %p70 = por %p68, %p69
      %p71 = scmp.ne.s32.totalorder %s63, %s66
      %p72 = scmp.eq.s32.totalorder %s15, 0
      %p73 = por %p71, %p72
      %p74 = scmp.ne.s32.totalorder %s63, %s66
      %p75 = scmp.eq.s32.totalorder %s20, 2
      %p76 = por %p74, %p75
      %p77 = scmp.ne.s32.totalorder %s66, %s67
      %p78 = scmp.eq.s32.totalorder %s20, 0
      %p79 = por %p77, %p78
      %p80 = scmp.ne.s32.totalorder %s66, %s67
      %p81 = scmp.eq.s32.totalorder %s21, 2
      %p82 = por %p80, %p81
      %p84 = scmp.ne.s32.totalorder %s67, %s83
      %p85 = scmp.eq.s32.totalorder %s21, 0
      %p86 = por %p84, %p85
      %s87 = ssub.s32 %s22, %s34
      %s88 = ssub.s32 %s23, %s30
      %s89 = sor.u32 %s87, %s88
      %p90 = scmp.eq.s32.totalorder %s89, 0
      %s92 = sadd.s32 %s91, 1
      %s93 = scalar_select %p90, %s91, %s92
      %p96 = pneg %p90
      %p97 = scmp.eq.s32.totalorder %s15, 2
      %p98 = por %p96, %p97
      %p99 = scmp.ne.s32.totalorder %s91, %s94
      %p100 = scmp.eq.s32.totalorder %s15, 0
      %p101 = por %p99, %p100
      %p102 = scmp.ne.s32.totalorder %s91, %s94
      %p103 = scmp.eq.s32.totalorder %s20, 2
      %p104 = por %p102, %p103
      %p105 = scmp.ne.s32.totalorder %s94, %s95
      %p106 = scmp.eq.s32.totalorder %s20, 0
      %p107 = por %p105, %p106
      %p108 = scmp.ne.s32.totalorder %s94, %s95
      %p109 = scmp.eq.s32.totalorder %s21, 2
      %p110 = por %p108, %p109
      %p112 = scmp.ne.s32.totalorder %s95, %s111
      %p113 = scmp.eq.s32.totalorder %s21, 0
      %p114 = por %p112, %p113
      %p115 = scmp.le.s32.totalorder 1, %s15
      %p116 = scmp.lt.s32.totalorder %s15, 4
      %p117 = pnand %p115, %p116
      %p118 = pneg %p117
      // Predicated region
      $region9: #{tpu_custom_call.1} parent=5 // pred_check
        _
      $region10: #{tpu_custom_call.1} parent=5 // pred_check_branch
        %120 = sbr.rel (%p117) target = $region12
      $region11: #{tpu_custom_call.1} parent=5 // pred_region
        %s121 = ssub.s32 %s15, 1
        // Predicated region
        $region13: #{tpu_custom_call.1} parent=11 // pred_check
          %p122 = pneg %p53
        $region14: #{tpu_custom_call.1} parent=11 // pred_check_branch
          %124 = sbr.rel (%p122) target = $region16
        $region15: #{tpu_custom_call.1} parent=11 // pred_region
          %s125 = smul.u32 2, %s24
          %s127 = ssub.s32 128, 128
          %128 = vsyncadd [#allocation3], %s127
          %s129 = smul.addr %s125, 64
          %s130 = scalar_lea.hbm %s0, %s129
          %s131 = sshll.u32 [#allocation2], 4
          %s132 = int_to_ptr.vmem [resolvable:$true] %s131
          %137 = dma.hbm_to_vmem [thread:$0]  %s130, 128, %s132, [#allocation3], 64, 64, 4
        $region16: #{tpu_custom_call.1} parent=11 // pred_fallthru
          _
      $region12: #{tpu_custom_call.1} parent=5 // pred_fallthru
        _
      %p138 = scmp.lt.s32.totalorder %s15, 3
      // Predicated region
      $region17: #{tpu_custom_call.1} parent=5 // pred_check
        %p139 = pneg %p138
      $region18: #{tpu_custom_call.1} parent=5 // pred_check_branch
        %141 = sbr.rel (%p139) target = $region20
      $region19: #{tpu_custom_call.1} parent=5 // pred_region
        // Predicated region
        $region21: #{tpu_custom_call.1} parent=19 // pred_check
          %p142 = pneg %p73
        $region22: #{tpu_custom_call.1} parent=19 // pred_check_branch
          %144 = sbr.rel (%p142) target = $region24
        $region23: #{tpu_custom_call.1} parent=19 // pred_region
          %s145 = sand.u32 %s63, 1
          %s146 = scalar_lea.sflag [#allocation6], %s145
          %s147 = sand.u32 %s63, 1
          %s148 = smul.addr %s147, 64
          %s149 = scalar_lea.vmem [#allocation5], %s148
          %s151 = ssub.s32 1024, 1024
          %152 = vsyncadd %s146, %s151
          %s153 = smul.addr %s23, 64
          %s154 = scalar_lea.hbm %s1, %s153
          %s155 = sshll.u32 %s149, 4
          %s156 = int_to_ptr.vmem [resolvable:$true] %s155
          %161 = dma.hbm_to_vmem [thread:$0]  %s154, 1024, %s156, %s146, 192, 64, 4
        $region24: #{tpu_custom_call.1} parent=19 // pred_fallthru
          _
      $region20: #{tpu_custom_call.1} parent=5 // pred_fallthru
        _
      %p162 = scmp.le.s32.totalorder 1, %s15
      %p163 = scmp.lt.s32.totalorder %s15, 4
      %p164 = pnand %p162, %p163
      %p165 = pneg %p164
      // Predicated region
      $region25: #{tpu_custom_call.1} parent=5 // pred_check
        _
      $region26: #{tpu_custom_call.1} parent=5 // pred_check_branch
        %167 = sbr.rel (%p164) target = $region28
      $region27: #{tpu_custom_call.1} parent=5 // pred_region
        %s168 = ssub.s32 %s15, 1
        // Predicated region
        $region29: #{tpu_custom_call.1} parent=27 // pred_check
          %p169 = pneg %p53
        $region30: #{tpu_custom_call.1} parent=27 // pred_check_branch
          %171 = sbr.rel (%p169) target = $region32
        $region31: #{tpu_custom_call.1} parent=27 // pred_region
          %172 = dma.done [#allocation3], 128
        $region32: #{tpu_custom_call.1} parent=27 // pred_fallthru
          _
        %s173 = sand.u32 %s66, 1
        %s174 = scalar_lea.sflag [#allocation6], %s173
        %s175 = sand.u32 %s66, 1
        %s176 = smul.addr %s175, 64
        %s177 = scalar_lea.vmem [#allocation5], %s176
        // Predicated region
        $region33: #{tpu_custom_call.1} parent=27 // pred_check
          %p178 = pneg %p79
        $region34: #{tpu_custom_call.1} parent=27 // pred_check_branch
          %180 = sbr.rel (%p178) target = $region36
        $region35: #{tpu_custom_call.1} parent=27 // pred_region
          %181 = dma.done %s174, 1024
        $region36: #{tpu_custom_call.1} parent=27 // pred_fallthru
          _
        %p182 = pneg %p53
        %p183 = pneg %p50
        %s184 = sand.u32 %s66, 1
        %s185 = scalar_lea.sflag [#allocation6], %s184
        %s186 = sand.u32 %s66, 1
        %s187 = smul.addr %s186, 64
        %s188 = scalar_lea.vmem [#allocation5], %s187
        %p189 = pneg %p79
        %p190 = pneg %p76
        %p191 = pneg %p107
        %p192 = pneg %p104
        %s193 = sand.u32 %s94, 1
        %s194 = scalar_lea.sflag [#allocation4], %s193
        %s195 = sand.u32 %s94, 1
        %s196 = smul.addr %s195, 16
        %s197 = scalar_lea.vmem [#allocation7], %s196
        %s198 = smul.u32 2, %s24
        %s199 = smul.u32 2, %s24
        %v201 = vld [vmem:[#allocation2] sm:$0xf]
        %v202 = vld [vmem:[#allocation2 + $0x4] sm:$0xf]
        %v203 = vld [vmem:[%s177] sm:$0xf]
        %v204 = vld [vmem:[%s177 + $0x4] sm:$0xf]
        %v205 = vld [vmem:[%s177 + $0x8] sm:$0xf]
        %v206 = vld [vmem:[%s177 + $0xc] sm:$0xf]
        %v207 = vld [vmem:[%s177 + $0x10] sm:$0xf]
        %v208 = vld [vmem:[%s177 + $0x14] sm:$0xf]
        %v209 = vld [vmem:[%s177 + $0x18] sm:$0xf]
        %v210 = vld [vmem:[%s177 + $0x1c] sm:$0xf]
        %v211 = vld [vmem:[%s177 + $0x20] sm:$0xf]
        %v212 = vld [vmem:[%s177 + $0x24] sm:$0xf]
        %v213 = vld [vmem:[%s177 + $0x28] sm:$0xf]
        %v214 = vld [vmem:[%s177 + $0x2c] sm:$0xf]
        %v215 = vld [vmem:[%s177 + $0x30] sm:$0xf]
        %v216 = vld [vmem:[%s177 + $0x34] sm:$0xf]
        %v217 = vld [vmem:[%s177 + $0x38] sm:$0xf]
        %v218 = vld [vmem:[%s177 + $0x3c] sm:$0xf]
        %v221 = vunpack.c.l.b16 %v201
        %v222 = vunpack.c.l.b16 %v202
        %v223 = vpack.c.b16 %v222, %v221
        %v241 = vunpack.c.l.b16 %v203
        %v242 = vunpack.c.l.b16 %v204
        %v243 = vunpack.c.l.b16 %v205
        %v244 = vunpack.c.l.b16 %v206
        %v245 = vunpack.c.l.b16 %v207
        %v246 = vunpack.c.l.b16 %v208
        %v247 = vunpack.c.l.b16 %v209
        %v248 = vunpack.c.l.b16 %v210
        %v249 = vunpack.c.l.b16 %v211
        %v250 = vunpack.c.l.b16 %v212
        %v251 = vunpack.c.l.b16 %v213
        %v252 = vunpack.c.l.b16 %v214
        %v253 = vunpack.c.l.b16 %v215
        %v254 = vunpack.c.l.b16 %v216
        %v255 = vunpack.c.l.b16 %v217
        %v256 = vunpack.c.l.b16 %v218
        %v257 = vpack.c.b16 %v242, %v241
        %v258 = vpack.c.b16 %v244, %v243
        %v259 = vpack.c.b16 %v246, %v245
        %v260 = vpack.c.b16 %v248, %v247
        %v261 = vpack.c.b16 %v250, %v249
        %v262 = vpack.c.b16 %v252, %v251
        %v263 = vpack.c.b16 %v254, %v253
        %v264 = vpack.c.b16 %v256, %v255
        %273 = vmatprep.subr.bf16.mxu0 0
        %274 = vmatpush1.bf16.msra.mxu0 %v257
        %275 = vmatprep.subr.bf16.mxu0 0
        %276 = vmatpush1.bf16.msra.mxu0 %v258
        %277 = vmatprep.subr.bf16.mxu0 0
        %278 = vmatpush1.bf16.msra.mxu0 %v259
        %279 = vmatprep.subr.bf16.mxu0 0
        %280 = vmatpush1.bf16.msra.mxu0 %v260
        %281 = vmatprep.subr.bf16.mxu0 0
        %282 = vmatpush1.bf16.msra.mxu0 %v261
        %283 = vmatprep.subr.bf16.mxu0 0
        %284 = vmatpush1.bf16.msra.mxu0 %v262
        %285 = vmatprep.subr.bf16.mxu0 0
        %286 = vmatpush1.bf16.msra.mxu0 %v263
        %287 = vmatprep.subr.bf16.mxu0 0
        %288 = vmatpush1.bf16.msra.mxu0 %v264
        %289 = vmatprep.subr.bf16.mxu0 0
        %290 = vmatpush1.bf16.msra.mxu0 0
        %291 = vmatprep.subr.bf16.mxu0 0
        %292 = vmatpush1.bf16.msra.mxu0 0
        %293 = vmatprep.subr.bf16.mxu0 0
        %294 = vmatpush1.bf16.msra.mxu0 0
        %295 = vmatprep.subr.bf16.mxu0 0
        %296 = vmatpush1.bf16.msra.mxu0 0
        %297 = vmatprep.subr.bf16.mxu0 0
        %298 = vmatpush1.bf16.msra.mxu0 0
        %299 = vmatprep.subr.bf16.mxu0 0
        %300 = vmatpush1.bf16.msra.mxu0 0
        %301 = vmatprep.subr.bf16.mxu0 0
        %302 = vmatpush1.bf16.msra.mxu0 0
        %303 = vmatprep.subr.bf16.mxu0 0
        %304 = vmatpush1.bf16.msra.mxu0 0
        %305 = vmatprep.mubr.bf16.mxu0 0
        %306 = vmatmul.mubr.bf16.gmra.mrb[0].mxu0 %v223
        %v307 = vpop.f32.mrb[0].mxu0
        %v308 = vadd.f32 0.0, %v307
        %v309 = vpop.f32.mrb[0].mxu0
        %v310 = vpop.f32.mrb[0].mxu0
        %v311 = vadd.f32 0.0, %v310
        %v312 = vpop.f32.mrb[0].mxu0
        %313 = vdwg.mxu0
        %314 = vst [vmem:[%s197] sm:$0xff] %v308
        %315 = vst [vmem:[%s197 + $0x8] sm:$0xff] %v311
        %s316 = sand.u32 %s94, 1
        %s317 = scalar_lea.sflag [#allocation4], %s316
        %s318 = sand.u32 %s94, 1
        %s319 = smul.addr %s318, 16
        %s320 = scalar_lea.vmem [#allocation7], %s319
        // Predicated region
        $region37: #{tpu_custom_call.1} parent=27 // pred_check
          %p321 = pneg %p104
        $region38: #{tpu_custom_call.1} parent=27 // pred_check_branch
          %323 = sbr.rel (%p321) target = $region40
        $region39: #{tpu_custom_call.1} parent=27 // pred_region
          %s324 = smul.u32 2, %s24
          %s326 = ssub.s32 256, 256
          %327 = vsyncadd %s317, %s326
          %s328 = smul.addr %s324, 3
          %s329 = sadd.s32 %s25, %s328
          %s330 = smul.addr %s329, 128
          %s331 = scalar_lea.hbm %s2, %s330
          %s332 = sshll.u32 %s320, 4
          %s333 = int_to_ptr.vmem [resolvable:$true] %s332
          %338 = dma.vmem_to_hbm [thread:$0]  %s333, 256, %s331, %s317, 128, 384, 8
        $region40: #{tpu_custom_call.1} parent=27 // pred_fallthru
          _
      $region28: #{tpu_custom_call.1} parent=5 // pred_fallthru
        _
      %p339 = scmp.le.s32.totalorder 2, %s15
      // Predicated region
      $region41: #{tpu_custom_call.1} parent=5 // pred_check
        %p340 = pneg %p339
      $region42: #{tpu_custom_call.1} parent=5 // pred_check_branch
        %342 = sbr.rel (%p340) target = $region44
      $region43: #{tpu_custom_call.1} parent=5 // pred_region
        %s343 = ssub.s32 %s15, 2
        // Predicated region
        $region45: #{tpu_custom_call.1} parent=43 // pred_check
          %p344 = pneg %p110
        $region46: #{tpu_custom_call.1} parent=43 // pred_check_branch
          %346 = sbr.rel (%p344) target = $region48
        $region47: #{tpu_custom_call.1} parent=43 // pred_region
          %s347 = sand.u32 %s95, 1
          %s348 = scalar_lea.sflag [#allocation4], %s347
          %s349 = sand.u32 %s95, 1
          %s350 = smul.addr %s349, 16
          %s351 = scalar_lea.vmem [#allocation7], %s350
          %352 = dma.done %s348, 256
        $region48: #{tpu_custom_call.1} parent=43 // pred_fallthru
          _
      $region44: #{tpu_custom_call.1} parent=5 // pred_fallthru
        _
    $region6: #{tpu_custom_call.1} parent=1 // loop_footer
      %s19 = sadd.s32 1, %s15
    $region7: #{tpu_custom_call.1} parent=1 // loop_footer_branch
      %14 = sbr.rel target = $region3
    $region8: #{tpu_custom_call.1} parent=1 // loop_exit
      _
    %353 = vsyncpa [#allocation3], 1
    %s354 = scalar_lea.sflag [#allocation3], 1
    %355 = vsyncpa %s354, 1
    %356 = vsyncpa [#allocation6], 1
    %s357 = scalar_lea.sflag [#allocation6], 1
    %358 = vsyncpa %s357, 1
    %359 = vsyncpa [#allocation4], 1
    %s360 = scalar_lea.sflag [#allocation4], 1
    %361 = vsyncpa %s360, 1

</llo_original>
